<compile_context>
chip_gen: v7x
topology: tpu7x:2x2x1
jax: 0.10.0
libtpu: 0.0.40
codegen_flags: <defaults>
</compile_context>

<pallas_src>
import math

import jax
import jax.numpy as jnp
from jax.experimental import pallas as pl
from jax.experimental.pallas import tpu as pltpu


def _gelu_tanh(x):
    # tanh-approximate GELU; exp/tanh lower to the TPU EUP. Keep math in f32.
    c = math.sqrt(2.0 / math.pi)
    return 0.5 * x * (1.0 + jnp.tanh(c * (x + 0.044715 * x * x * x)))


def _round_up(n, m):
    return ((n + m - 1) // m) * m


def star_kernel(
    x_ref,      # (Bt, C, Dsp)  input slab for this batch tile
    w1_ref,     # (Dsp, Dsp)    gen1 weight, (in, out) layout
    b1_ref,     # (1, Dsp)
    w2_ref,     # (Dsp, Dcp)    gen2 weight
    b2_ref,     # (1, Dcp)
    w3a_ref,    # (Dsp, Dsp)    gen3 weight, slice acting on `input`
    w3b_ref,    # (Dcp, Dsp)    gen3 weight, slice acting on pooled core
    b3_ref,     # (1, Dsp)
    w4_ref,     # (Dsp, Dsp)    gen4 weight
    b4_ref,     # (1, Dsp)
    o_ref,      # (Bt, C, Dsp)  output slab
):
    Bt, C, Dsp = x_ref.shape
    mm_dtype = w1_ref.dtype  # dtype fed to the MXU (f32 or bf16)

    # Collapse (Bt, C) into the matmul M dimension (free reshape: last dim kept).
    x2 = x_ref[...].reshape(Bt * C, Dsp).astype(mm_dtype)

    # --- gen1 + GELU (f32 accumulate / f32 elementwise) ---------------------
    h1 = jnp.dot(x2, w1_ref[...], preferred_element_type=jnp.float32)
    h1 = _gelu_tanh(h1 + b1_ref[...])

    # --- gen2 ---------------------------------------------------------------
    cm = jnp.dot(h1.astype(mm_dtype), w2_ref[...],
                 preferred_element_type=jnp.float32) + b2_ref[...]   # (Bt*C, Dcp)

    # --- softmax-weighted average over the channel axis, per batch element ---
    Dcp = cm.shape[-1]
    cm3 = cm.reshape(Bt, C, Dcp)
    m = jnp.max(cm3, axis=1, keepdims=True)
    e = jnp.exp(cm3 - m)
    denom = jnp.sum(e, axis=1)                          # (Bt, Dcp)
    num = jnp.sum(cm3 * e, axis=1)                      # (Bt, Dcp)
    # One small EUP reciprocal instead of a full (Bt*C, Dcp) VPU divide.
    pooled = num * pl.reciprocal(denom, approx=True)    # (Bt, Dcp)

    # --- gen3 on concat([input, pooled]) + GELU ------------------------------
    # concat folded into a split matmul: cat @ W3 = x @ W3a + pooled @ W3b.
    # The pooled part is a per-batch row, computed once and broadcast over C.
    pool_row = jnp.dot(pooled.astype(mm_dtype), w3b_ref[...],
                       preferred_element_type=jnp.float32) + b3_ref[...]   # (Bt, Dsp)
    h3 = jnp.dot(x2, w3a_ref[...], preferred_element_type=jnp.float32)
    h3 = _gelu_tanh(h3.reshape(Bt, C, Dsp) + pool_row[:, None, :])

    # --- gen4 ---------------------------------------------------------------
    out = jnp.dot(h3.reshape(Bt * C, Dsp).astype(mm_dtype), w4_ref[...],
                  preferred_element_type=jnp.float32) + b4_ref[...]
    o_ref[...] = out.reshape(Bt, C, Dsp).astype(o_ref.dtype)


def star_forward(x, params, *, block_batch=None, compute_dtype=None,
                 interpret=False):
    """Eval-mode STAR forward. x: (B, C, d_series). params: see init_star_params.

    compute_dtype: dtype for x/weights fed to the MXU (e.g. jnp.bfloat16 on
    v6e/v7x to halve HBM traffic); accumulation and elementwise math stay f32.
    """
    B, C, Ds = x.shape
    Dc = params["w2"].shape[1]
    out_dtype = x.dtype
    compute_dtype = compute_dtype or x.dtype

    # Lane-dense padding (weights padded once here; output sliced after).
    Dsp = _round_up(Ds, 128)
    Dcp = _round_up(Dc, 128)

    def pad2(a, rows, cols):
        return jnp.pad(a, ((0, rows - a.shape[0]), (0, cols - a.shape[1])))

    w1 = pad2(params["w1"], Dsp, Dsp).astype(compute_dtype)
    b1 = pad2(params["b1"], 1, Dsp).astype(jnp.float32)
    w2 = pad2(params["w2"], Dsp, Dcp).astype(compute_dtype)
    b2 = pad2(params["b2"], 1, Dcp).astype(jnp.float32)
    w3a = pad2(params["w3a"], Dsp, Dsp).astype(compute_dtype)
    w3b = pad2(params["w3b"], Dcp, Dsp).astype(compute_dtype)
    b3 = pad2(params["b3"], 1, Dsp).astype(jnp.float32)
    w4 = pad2(params["w4"], Dsp, Dsp).astype(compute_dtype)
    b4 = pad2(params["b4"], 1, Dsp).astype(jnp.float32)

    # Batch tile: aim for ~256 MXU rows per step (128 already saturates v5e's
    # 128-wide MXU; 256 saturates v6e/v7x), bounded by a VMEM block budget, and
    # keep >= 2 grid steps when B > 1 so v7x can shard across both TensorCores.
    if block_batch is None:
        bt = min(B, max(1, 256 // max(C, 1)))
        while bt > 1 and bt * C * Dsp * 4 > 8 * 1024 * 1024:  # ~8 MiB/block cap
            bt //= 2
        if B > 1 and -(-B // bt) < 2:
            bt = -(-B // 2)
    else:
        bt = block_batch
    Bp = _round_up(B, bt)
    grid = Bp // bt

    xp = x
    if Bp != B or Dsp != Ds:
        xp = jnp.pad(x, ((0, Bp - B), (0, 0), (0, Dsp - Ds)))
    xp = xp.astype(compute_dtype)

    full = lambda shape: pl.BlockSpec(shape, lambda b: (0,) * len(shape))

    # Advisory cost estimate (helps XLA schedule around the custom call).
    flops = int(2 * Bp * C * Dsp * (3 * Dsp + Dcp) + 2 * Bp * Dcp * Dsp)
    transcendentals = int(Bp * C * (2 * Dsp + Dcp) + Bp * Dcp)
    bytes_accessed = int(
        xp.size * xp.dtype.itemsize
        + Bp * C * Dsp * jnp.dtype(out_dtype).itemsize
        + sum(int(a.size) * a.dtype.itemsize
              for a in (w1, b1, w2, b2, w3a, w3b, b3, w4, b4)))

    out = pl.pallas_call(
        star_kernel,
        out_shape=jax.ShapeDtypeStruct((Bp, C, Dsp), out_dtype),
        grid_spec=pl.GridSpec(
            grid=(grid,),
            in_specs=[
                pl.BlockSpec((bt, C, Dsp), lambda b: (b, 0, 0)),   # x
                full((Dsp, Dsp)), full((1, Dsp)),                  # gen1
                full((Dsp, Dcp)), full((1, Dcp)),                  # gen2
                full((Dsp, Dsp)), full((Dcp, Dsp)), full((1, Dsp)),  # gen3 split
                full((Dsp, Dsp)), full((1, Dsp)),                  # gen4
            ],
            out_specs=pl.BlockSpec((bt, C, Dsp), lambda b: (b, 0, 0)),
        ),
        compiler_params=pltpu.CompilerParams(
            dimension_semantics=("parallel",),
            vmem_limit_bytes=48 * 1024 * 1024,   # stays inside v7x's 64 MiB/TC
        ),
        cost_estimate=pl.CostEstimate(
            flops=flops,
            transcendentals=transcendentals,
            bytes_accessed=bytes_accessed,
        ),
        interpret=interpret,
    )(xp, w1, b1, w2, b2, w3a, w3b, b3, w4, b4)

    return out[:B, :, :Ds]


def init_star_params(key, d_series, d_core):
    """Deterministic init mimicking nn.Linear's uniform(-1/sqrt(fan_in), +)."""
    ks = jax.random.split(key, 8)

    def lin(kw, kb, fan_in, fan_out):
        bound = 1.0 / math.sqrt(fan_in)
        # PyTorch stores weight as (out, in); we keep transposed (in, out) so
        # the kernel computes x @ W directly.
        w = jax.random.uniform(kw, (fan_in, fan_out), jnp.float32, -bound, bound)
        b = jax.random.uniform(kb, (1, fan_out), jnp.float32, -bound, bound)
        return w, b

    w1, b1 = lin(ks[0], ks[1], d_series, d_series)
    w2, b2 = lin(ks[2], ks[3], d_series, d_core)
    w3, b3 = lin(ks[4], ks[5], d_series + d_core, d_series)
    w4, b4 = lin(ks[6], ks[7], d_series, d_series)

    return {
        "w1": w1, "b1": b1,
        "w2": w2, "b2": b2,
        # split gen3's (d_series + d_core, d_series) weight along its input dim
        "w3a": w3[:d_series], "w3b": w3[d_series:], "b3": b3,
        "w4": w4, "b4": b4,
    }


def star_reference(x, params):
    """Pure-JAX reference of the eval-mode forward (for sanity check)."""
    h1 = _gelu_tanh(x @ params["w1"] + params["b1"])
    cm = h1 @ params["w2"] + params["b2"]
    weight = jax.nn.softmax(cm, axis=1)
    pooled = jnp.sum(cm * weight, axis=1, keepdims=True)       # (B, 1, Dc)
    h3 = _gelu_tanh(x @ params["w3a"] + pooled @ params["w3b"] + params["b3"])
    return h3 @ params["w4"] + params["b4"]


if __name__ == "__main__":
    B, C, D_SERIES, D_CORE = 4, 8, 32, 16

    key = jax.random.PRNGKey(0)
    k_x, k_p = jax.random.split(key)

    x = jax.random.normal(k_x, (B, C, D_SERIES), dtype=jnp.float32)
    params = init_star_params(k_p, D_SERIES, D_CORE)

    ref = star_reference(x, params)

    # f32 path
    out = jax.block_until_ready(star_forward(x, params))
    assert out.shape == (B, C, D_SERIES)
    err = float(jnp.max(jnp.abs(out - ref)))
    assert err < 5e-3, err   # approx reciprocal + accumulation-order difference

    # bf16-storage path (v6e/v7x: half HBM traffic, bf16 MXU), looser tolerance.
    out_bf16 = jax.block_until_ready(
        star_forward(x, params, compute_dtype=jnp.bfloat16))
    err_bf16 = float(jnp.max(jnp.abs(out_bf16 - ref)))
    assert err_bf16 < 5e-2, err_bf16

    print("KERNEL_OK")
</pallas_src>

<mosaic_0001>
module attributes {stable_mosaic.version = 11 : i64} {
  func.func @star_kernel(%arg0: i32, %arg1: memref<2x8x128xf32, #tpu.memory_space<vmem>>, %arg2: memref<128x128xf32, #tpu.memory_space<vmem>>, %arg3: memref<1x128xf32, #tpu.memory_space<vmem>>, %arg4: memref<128x128xf32, #tpu.memory_space<vmem>>, %arg5: memref<1x128xf32, #tpu.memory_space<vmem>>, %arg6: memref<128x128xf32, #tpu.memory_space<vmem>>, %arg7: memref<128x128xf32, #tpu.memory_space<vmem>>, %arg8: memref<1x128xf32, #tpu.memory_space<vmem>>, %arg9: memref<128x128xf32, #tpu.memory_space<vmem>>, %arg10: memref<1x128xf32, #tpu.memory_space<vmem>>, %arg11: memref<2x8x128xf32, #tpu.memory_space<vmem>>) attributes {dimension_semantics = [#tpu.dimension_semantics<parallel>], iteration_bounds = array<i64: 2>, scalar_prefetch = 0 : i64, scratch_operands = 0 : i64, tpu.core_type = #tpu.core_type<tc>, window_params = [{transform_indices = @transform_0, window_bounds = array<i64: 2, 8, 128>}, {pipeline_mode = #tpu.pipeline_mode<synchronous>, transform_indices = @transform_1, window_bounds = array<i64: 128, 128>}, {pipeline_mode = #tpu.pipeline_mode<synchronous>, transform_indices = @transform_2, window_bounds = array<i64: 1, 128>}, {pipeline_mode = #tpu.pipeline_mode<synchronous>, transform_indices = @transform_3, window_bounds = array<i64: 128, 128>}, {pipeline_mode = #tpu.pipeline_mode<synchronous>, transform_indices = @transform_4, window_bounds = array<i64: 1, 128>}, {pipeline_mode = #tpu.pipeline_mode<synchronous>, transform_indices = @transform_5, window_bounds = array<i64: 128, 128>}, {pipeline_mode = #tpu.pipeline_mode<synchronous>, transform_indices = @transform_6, window_bounds = array<i64: 128, 128>}, {pipeline_mode = #tpu.pipeline_mode<synchronous>, transform_indices = @transform_7, window_bounds = array<i64: 1, 128>}, {pipeline_mode = #tpu.pipeline_mode<synchronous>, transform_indices = @transform_8, window_bounds = array<i64: 128, 128>}, {pipeline_mode = #tpu.pipeline_mode<synchronous>, transform_indices = @transform_9, window_bounds = array<i64: 1, 128>}, {transform_indices = @transform_10, window_bounds = array<i64: 2, 8, 128>}]} {
    %c0 = arith.constant 0 : index
    %c0_0 = arith.constant 0 : index
    %c0_1 = arith.constant 0 : index
    %0 = vector.load %arg1[%c0, %c0_0, %c0_1] : memref<2x8x128xf32, #tpu.memory_space<vmem>>, vector<2x8x128xf32>
    %1 = vector.shape_cast %0 : vector<2x8x128xf32> to vector<16x128xf32>
    %c0_2 = arith.constant 0 : index
    %c0_3 = arith.constant 0 : index
    %2 = vector.load %arg2[%c0_2, %c0_3] : memref<128x128xf32, #tpu.memory_space<vmem>>, vector<128x128xf32>
    %cst = arith.constant dense<0.000000e+00> : vector<16x128xf32>
    %3 = tpu.matmul %1, %2, %cst {dimension_numbers = #tpu.dot_dimension_numbers<[1], [0], [0], [1], [0, 0, 1, 1], [], []>} : vector<16x128xf32>, vector<128x128xf32>, vector<16x128xf32> -> vector<16x128xf32>
    %c0_4 = arith.constant 0 : index
    %c0_5 = arith.constant 0 : index
    %4 = vector.load %arg3[%c0_4, %c0_5] : memref<1x128xf32, #tpu.memory_space<vmem>>, vector<1x128xf32>
    %5 = vector.broadcast %4 : vector<1x128xf32> to vector<16x128xf32>
    %6 = arith.addf %3, %5 : vector<16x128xf32>
    %cst_6 = arith.constant 5.000000e-01 : f32
    %7 = vector.broadcast %cst_6 : f32 to vector<16x128xf32>
    %8 = arith.mulf %7, %6 : vector<16x128xf32>
    %cst_7 = arith.constant 4.471500e-02 : f32
    %9 = vector.broadcast %cst_7 : f32 to vector<16x128xf32>
    %10 = arith.mulf %9, %6 : vector<16x128xf32>
    %11 = arith.mulf %10, %6 : vector<16x128xf32>
    %12 = arith.mulf %11, %6 : vector<16x128xf32>
    %13 = arith.addf %6, %12 : vector<16x128xf32>
    %cst_8 = arith.constant 0.797884583 : f32
    %14 = vector.broadcast %cst_8 : f32 to vector<16x128xf32>
    %15 = arith.mulf %14, %13 : vector<16x128xf32>
    %16 = math.tanh %15 : vector<16x128xf32>
    %cst_9 = arith.constant 1.000000e+00 : f32
    %17 = vector.broadcast %cst_9 : f32 to vector<16x128xf32>
    %18 = arith.addf %17, %16 : vector<16x128xf32>
    %19 = arith.mulf %8, %18 : vector<16x128xf32>
    %c0_10 = arith.constant 0 : index
    %c0_11 = arith.constant 0 : index
    %20 = vector.load %arg4[%c0_10, %c0_11] : memref<128x128xf32, #tpu.memory_space<vmem>>, vector<128x128xf32>
    %cst_12 = arith.constant dense<0.000000e+00> : vector<16x128xf32>
    %21 = tpu.matmul %19, %20, %cst_12 {dimension_numbers = #tpu.dot_dimension_numbers<[1], [0], [0], [1], [0, 0, 1, 1], [], []>} : vector<16x128xf32>, vector<128x128xf32>, vector<16x128xf32> -> vector<16x128xf32>
    %c0_13 = arith.constant 0 : index
    %c0_14 = arith.constant 0 : index
    %22 = vector.load %arg5[%c0_13, %c0_14] : memref<1x128xf32, #tpu.memory_space<vmem>>, vector<1x128xf32>
    %23 = vector.broadcast %22 : vector<1x128xf32> to vector<16x128xf32>
    %24 = arith.addf %21, %23 : vector<16x128xf32>
    %25 = vector.shape_cast %24 : vector<16x128xf32> to vector<2x8x128xf32>
    %cst_15 = arith.constant dense<0xFF800000> : vector<2x128xf32>
    %26 = vector.multi_reduction <maximumf>, %25, %cst_15 [1] : vector<2x8x128xf32> to vector<2x128xf32>
    %27 = vector.shape_cast %26 : vector<2x128xf32> to vector<2x1x128xf32>
    %28 = vector.broadcast %27 : vector<2x1x128xf32> to vector<2x8x128xf32>
    %29 = arith.subf %25, %28 : vector<2x8x128xf32>
    %30 = math.exp %29 : vector<2x8x128xf32>
    %cst_16 = arith.constant dense<0.000000e+00> : vector<2x128xf32>
    %31 = vector.multi_reduction <add>, %30, %cst_16 [1] : vector<2x8x128xf32> to vector<2x128xf32>
    %32 = arith.mulf %25, %30 : vector<2x8x128xf32>
    %cst_17 = arith.constant dense<0.000000e+00> : vector<2x128xf32>
    %33 = vector.multi_reduction <add>, %32, %cst_17 [1] : vector<2x8x128xf32> to vector<2x128xf32>
    %34 = tpu.reciprocal %31 {approx = true} : vector<2x128xf32> -> vector<2x128xf32>
    %35 = arith.mulf %33, %34 : vector<2x128xf32>
    %c0_18 = arith.constant 0 : index
    %c0_19 = arith.constant 0 : index
    %36 = vector.load %arg7[%c0_18, %c0_19] : memref<128x128xf32, #tpu.memory_space<vmem>>, vector<128x128xf32>
    %cst_20 = arith.constant dense<0.000000e+00> : vector<2x128xf32>
    %37 = tpu.matmul %35, %36, %cst_20 {dimension_numbers = #tpu.dot_dimension_numbers<[1], [0], [0], [1], [0, 0, 1, 1], [], []>} : vector<2x128xf32>, vector<128x128xf32>, vector<2x128xf32> -> vector<2x128xf32>
    %c0_21 = arith.constant 0 : index
    %c0_22 = arith.constant 0 : index
    %38 = vector.load %arg8[%c0_21, %c0_22] : memref<1x128xf32, #tpu.memory_space<vmem>>, vector<1x128xf32>
    %39 = vector.broadcast %38 : vector<1x128xf32> to vector<2x128xf32>
    %40 = arith.addf %37, %39 : vector<2x128xf32>
    %c0_23 = arith.constant 0 : index
    %c0_24 = arith.constant 0 : index
    %41 = vector.load %arg6[%c0_23, %c0_24] : memref<128x128xf32, #tpu.memory_space<vmem>>, vector<128x128xf32>
    %cst_25 = arith.constant dense<0.000000e+00> : vector<16x128xf32>
    %42 = tpu.matmul %1, %41, %cst_25 {dimension_numbers = #tpu.dot_dimension_numbers<[1], [0], [0], [1], [0, 0, 1, 1], [], []>} : vector<16x128xf32>, vector<128x128xf32>, vector<16x128xf32> -> vector<16x128xf32>
    %43 = vector.shape_cast %42 : vector<16x128xf32> to vector<2x8x128xf32>
    %44 = vector.shape_cast %40 : vector<2x128xf32> to vector<2x1x128xf32>
    %45 = vector.broadcast %44 : vector<2x1x128xf32> to vector<2x8x128xf32>
    %46 = arith.addf %43, %45 : vector<2x8x128xf32>
    %cst_26 = arith.constant 5.000000e-01 : f32
    %47 = vector.broadcast %cst_26 : f32 to vector<2x8x128xf32>
    %48 = arith.mulf %47, %46 : vector<2x8x128xf32>
    %cst_27 = arith.constant 4.471500e-02 : f32
    %49 = vector.broadcast %cst_27 : f32 to vector<2x8x128xf32>
    %50 = arith.mulf %49, %46 : vector<2x8x128xf32>
    %51 = arith.mulf %50, %46 : vector<2x8x128xf32>
    %52 = arith.mulf %51, %46 : vector<2x8x128xf32>
    %53 = arith.addf %46, %52 : vector<2x8x128xf32>
    %cst_28 = arith.constant 0.797884583 : f32
    %54 = vector.broadcast %cst_28 : f32 to vector<2x8x128xf32>
    %55 = arith.mulf %54, %53 : vector<2x8x128xf32>
    %56 = math.tanh %55 : vector<2x8x128xf32>
    %cst_29 = arith.constant 1.000000e+00 : f32
    %57 = vector.broadcast %cst_29 : f32 to vector<2x8x128xf32>
    %58 = arith.addf %57, %56 : vector<2x8x128xf32>
    %59 = arith.mulf %48, %58 : vector<2x8x128xf32>
    %60 = vector.shape_cast %59 : vector<2x8x128xf32> to vector<16x128xf32>
    %c0_30 = arith.constant 0 : index
    %c0_31 = arith.constant 0 : index
    %61 = vector.load %arg9[%c0_30, %c0_31] : memref<128x128xf32, #tpu.memory_space<vmem>>, vector<128x128xf32>
    %cst_32 = arith.constant dense<0.000000e+00> : vector<16x128xf32>
    %62 = tpu.matmul %60, %61, %cst_32 {dimension_numbers = #tpu.dot_dimension_numbers<[1], [0], [0], [1], [0, 0, 1, 1], [], []>} : vector<16x128xf32>, vector<128x128xf32>, vector<16x128xf32> -> vector<16x128xf32>
    %c0_33 = arith.constant 0 : index
    %c0_34 = arith.constant 0 : index
    %63 = vector.load %arg10[%c0_33, %c0_34] : memref<1x128xf32, #tpu.memory_space<vmem>>, vector<1x128xf32>
    %64 = vector.broadcast %63 : vector<1x128xf32> to vector<16x128xf32>
    %65 = arith.addf %62, %64 : vector<16x128xf32>
    %66 = vector.shape_cast %65 : vector<16x128xf32> to vector<2x8x128xf32>
    %c0_35 = arith.constant 0 : index
    %c0_36 = arith.constant 0 : index
    %c0_37 = arith.constant 0 : index
    %67 = vector.load %arg11[%c0_35, %c0_36, %c0_37] : memref<2x8x128xf32, #tpu.memory_space<vmem>>, vector<2x8x128xf32>
    tpu.vector_store %arg11[%c0_35, %c0_36, %c0_37], %66 {strides = array<i32>} : memref<2x8x128xf32, #tpu.memory_space<vmem>>, vector<2x8x128xf32>,
    return
  }
  func.func @transform_0(%arg0: i32) -> (i32, i32, i32) {
    %c0_i32 = arith.constant 0 : i32
    %c0_i32_0 = arith.constant 0 : i32
    %c0_i32_1 = arith.constant 0 : i32
    return %arg0, %c0_i32, %c0_i32_0 : i32, i32, i32
  }
  func.func @transform_1(%arg0: i32) -> (i32, i32) {
    %c0_i32 = arith.constant 0 : i32
    %c0_i32_0 = arith.constant 0 : i32
    %c0_i32_1 = arith.constant 0 : i32
    return %c0_i32, %c0_i32_0 : i32, i32
  }
  func.func @transform_2(%arg0: i32) -> (i32, i32) {
    %c0_i32 = arith.constant 0 : i32
    %c0_i32_0 = arith.constant 0 : i32
    %c0_i32_1 = arith.constant 0 : i32
    return %c0_i32, %c0_i32_0 : i32, i32
  }
  func.func @transform_3(%arg0: i32) -> (i32, i32) {
    %c0_i32 = arith.constant 0 : i32
    %c0_i32_0 = arith.constant 0 : i32
    %c0_i32_1 = arith.constant 0 : i32
    return %c0_i32, %c0_i32_0 : i32, i32
  }
  func.func @transform_4(%arg0: i32) -> (i32, i32) {
    %c0_i32 = arith.constant 0 : i32
    %c0_i32_0 = arith.constant 0 : i32
    %c0_i32_1 = arith.constant 0 : i32
    return %c0_i32, %c0_i32_0 : i32, i32
  }
  func.func @transform_5(%arg0: i32) -> (i32, i32) {
    %c0_i32 = arith.constant 0 : i32
    %c0_i32_0 = arith.constant 0 : i32
    %c0_i32_1 = arith.constant 0 : i32
    return %c0_i32, %c0_i32_0 : i32, i32
  }
  func.func @transform_6(%arg0: i32) -> (i32, i32) {
    %c0_i32 = arith.constant 0 : i32
    %c0_i32_0 = arith.constant 0 : i32
    %c0_i32_1 = arith.constant 0 : i32
    return %c0_i32, %c0_i32_0 : i32, i32
  }
  func.func @transform_7(%arg0: i32) -> (i32, i32) {
    %c0_i32 = arith.constant 0 : i32
    %c0_i32_0 = arith.constant 0 : i32
    %c0_i32_1 = arith.constant 0 : i32
    return %c0_i32, %c0_i32_0 : i32, i32
  }
  func.func @transform_8(%arg0: i32) -> (i32, i32) {
    %c0_i32 = arith.constant 0 : i32
    %c0_i32_0 = arith.constant 0 : i32
    %c0_i32_1 = arith.constant 0 : i32
    return %c0_i32, %c0_i32_0 : i32, i32
  }
  func.func @transform_9(%arg0: i32) -> (i32, i32) {
    %c0_i32 = arith.constant 0 : i32
    %c0_i32_0 = arith.constant 0 : i32
    %c0_i32_1 = arith.constant 0 : i32
    return %c0_i32, %c0_i32_0 : i32, i32
  }
  func.func @transform_10(%arg0: i32) -> (i32, i32, i32) {
    %c0_i32 = arith.constant 0 : i32
    %c0_i32_0 = arith.constant 0 : i32
    %c0_i32_1 = arith.constant 0 : i32
    return %arg0, %c0_i32, %c0_i32_0 : i32, i32, i32
  }
}

</mosaic_0001>

<llo_original>
// kernel: tpu_custom_call.1
$region0: #{tpu_custom_call.1}
  #allocation0 [shape = 'u32[]', space=smem, size = 0x4, offset = 0x4, fixed_abs, tag = 'smem constant byte address 0x4 - core index']
  #allocation1 [shape = 'u32[144,128]{1,0:T(1,128)}', space=vmem, size = 0x12000, scoped, tag = 'internal scratch']
  %s0 = inlined_call_operand.hbm [shape: f32[4,8,128], index: 0, kind: input, shape index: {}]
  %s1 = inlined_call_operand.hbm [shape: f32[128,128], index: 1, kind: input, shape index: {}]
  %s2 = inlined_call_operand.vmem [shape: f32[1,128], index: 2, kind: input, shape index: {}]
  %s3 = inlined_call_operand.hbm [shape: f32[128,128], index: 3, kind: input, shape index: {}]
  %s4 = inlined_call_operand.vmem [shape: f32[1,128], index: 4, kind: input, shape index: {}]
  %s5 = inlined_call_operand.hbm [shape: f32[128,128], index: 5, kind: input, shape index: {}]
  %s6 = inlined_call_operand.hbm [shape: f32[128,128], index: 6, kind: input, shape index: {}]
  %s7 = inlined_call_operand.vmem [shape: f32[1,128], index: 7, kind: input, shape index: {}]
  %s8 = inlined_call_operand.hbm [shape: f32[128,128], index: 8, kind: input, shape index: {}]
  %s9 = inlined_call_operand.vmem [shape: f32[1,128], index: 9, kind: input, shape index: {}]
  %s10 = inlined_call_operand.hbm [shape: f32[4,8,128], index: 10, kind: output, shape index: {}]
  %s11 = sld [smem:[#allocation0]]
  $region97: #{tpu_custom_call.1} parent=0
    _
  %s13 = ssub.s32 1, %s11
  %s14 = scalar_select 0, %s13, %s11
  $region1: #{tpu_custom_call.1} parent=0
    #allocation2 [shape = 'u8[16384]{0}', space=vmem, size = 0x4000, scoped, tag = 'input window, operand 0']
    #allocation3 [shape = 's32[2]{0}', space=sflag, size = 0x8, scoped, tag = 'scoped memory for tpu_custom_call.1']
    #allocation4 [shape = 's32[2]{0}', space=sflag, size = 0x8, scoped, tag = 'scoped memory for tpu_custom_call.1']
    #allocation5 [shape = 'u8[65536]{0}', space=vmem, size = 0x10000, scoped, tag = 'input window, operand 1, single buffered']
    #allocation6 [shape = 's32[1]{0}', space=sflag, size = 0x4, scoped, tag = 'scoped memory for tpu_custom_call.1']
    #allocation7 [shape = 'u8[65536]{0}', space=vmem, size = 0x10000, scoped, tag = 'input window, operand 3, single buffered']
    #allocation8 [shape = 'u8[65536]{0}', space=vmem, size = 0x10000, scoped, tag = 'input window, operand 5, single buffered']
    #allocation9 [shape = 's32[1]{0}', space=sflag, size = 0x4, scoped, tag = 'scoped memory for tpu_custom_call.1']
    #allocation10 [shape = 'u8[65536]{0}', space=vmem, size = 0x10000, scoped, tag = 'input window, operand 6, single buffered']
    #allocation11 [shape = 'u8[65536]{0}', space=vmem, size = 0x10000, scoped, tag = 'input window, operand 8, single buffered']
    #allocation12 [shape = 's32[1]{0}', space=sflag, size = 0x4, scoped, tag = 'scoped memory for tpu_custom_call.1']
    #allocation13 [shape = 'u8[16384]{0}', space=vmem, size = 0x4000, scoped, tag = 'output window, operand 0']
    %15 = vsyncpa [#allocation3], 0
    %s16 = scalar_lea.sflag [#allocation3], 1
    %17 = vsyncpa %s16, 0
    %18 = vsyncpa [#allocation6], 0
    %19 = vsyncpa [#allocation9], 0
    %20 = vsyncpa [#allocation12], 0
    %21 = vsyncpa [#allocation4], 0
    %s22 = scalar_lea.sflag [#allocation4], 1
    %23 = vsyncpa %s22, 0
    loop: start=0, step=1, limit=4
    $region2: #{tpu_custom_call.1} parent=1 // loop_pre_header
      _
    $region3: #{tpu_custom_call.1} parent=1 // loop_header
      %s25 = sphi 0, %s29
      %p26 = scmp.ge.s32.totalorder %s25, 4
      %s35 = sphi 0, %s37
      %s38 = sphi 0, %s35
      %s39 = sphi 0, %s38
      %s55 = sphi 0, %s39
      %s59 = sphi 0, %s59
      %s61 = sphi 0, %s59
      %s62 = sphi 0, %s61
      %s76 = sphi 0, %s62
      %s80 = sphi 0, %s80
      %s82 = sphi 0, %s80
      %s83 = sphi 0, %s82
      %s97 = sphi 0, %s83
      %s101 = sphi 0, %s101
      %s103 = sphi 0, %s101
      %s104 = sphi 0, %s103
      %s118 = sphi 0, %s104
      %s122 = sphi 0, %s122
      %s124 = sphi 0, %s122
      %s125 = sphi 0, %s124
      %s139 = sphi 0, %s125
      %s143 = sphi 0, %s143
      %s145 = sphi 0, %s143
      %s146 = sphi 0, %s145
      %s160 = sphi 0, %s146
      %s164 = sphi 0, %s164
      %s166 = sphi 0, %s164
      %s167 = sphi 0, %s166
      %s181 = sphi 0, %s167
      %s185 = sphi 0, %s185
      %s187 = sphi 0, %s185
      %s188 = sphi 0, %s187
      %s202 = sphi 0, %s188
      %s206 = sphi 0, %s206
      %s208 = sphi 0, %s206
      %s209 = sphi 0, %s208
      %s223 = sphi 0, %s209
      %s227 = sphi 0, %s227
      %s229 = sphi 0, %s227
      %s230 = sphi 0, %s229
      %s244 = sphi 0, %s230
      %s250 = sphi 0, %s252
      %s253 = sphi 0, %s250
      %s254 = sphi 0, %s253
      %s270 = sphi 0, %s254
    $region4: #{tpu_custom_call.1} parent=1 // loop_header_branch
      %28 = sbr.rel (%p26) target = $region8
    $region5: #{tpu_custom_call.1} parent=1 // loop_body
      %s30 = ssub.s32 %s25, 1
      %s31 = ssub.s32 %s25, 2
      %s32 = sadd.s32 %s25, 1
      %s33 = ssub.s32 %s25, %s32
      %p34 = scmp.eq.s32.totalorder %s33, 0
      %s36 = sadd.s32 %s35, 1
      %s37 = scalar_select %p34, %s35, %s36
      %p40 = pneg %p34
      %p41 = scmp.eq.s32.totalorder %s25, 1
      %p42 = por %p40, %p41
      %p43 = scmp.ne.s32.totalorder %s35, %s38
      %p44 = scmp.eq.s32.totalorder %s25, 0
      %p45 = por %p43, %p44
      %p46 = scmp.ne.s32.totalorder %s35, %s38
      %p47 = scmp.eq.s32.totalorder %s30, 1
      %p48 = por %p46, %p47
      %p49 = scmp.ne.s32.totalorder %s38, %s39
      %p50 = scmp.eq.s32.totalorder %s30, 0
      %p51 = por %p49, %p50
      %p52 = scmp.ne.s32.totalorder %s38, %s39
      %p53 = scmp.eq.s32.totalorder %s31, 1
      %p54 = por %p52, %p53
      %p56 = scmp.ne.s32.totalorder %s39, %s55
      %p57 = scmp.eq.s32.totalorder %s31, 0
      %p58 = por %p56, %p57
      %s60 = sadd.s32 %s59, 1
      %p63 = scmp.eq.s32.totalorder %s25, 1
      %p64 = scmp.ne.s32.totalorder %s59, %s61
      %p65 = scmp.eq.s32.totalorder %s25, 0
      %p66 = por %p64, %p65
      %p67 = scmp.ne.s32.totalorder %s59, %s61
      %p68 = scmp.eq.s32.totalorder %s30, 1
      %p69 = por %p67, %p68
      %p70 = scmp.ne.s32.totalorder %s61, %s62
      %p71 = scmp.eq.s32.totalorder %s30, 0
      %p72 = por %p70, %p71
      %p73 = scmp.ne.s32.totalorder %s61, %s62
      %p74 = scmp.eq.s32.totalorder %s31, 1
      %p75 = por %p73, %p74
      %p77 = scmp.ne.s32.totalorder %s62, %s76
      %p78 = scmp.eq.s32.totalorder %s31, 0
      %p79 = por %p77, %p78
      %s81 = sadd.s32 %s80, 1
      %p84 = scmp.eq.s32.totalorder %s25, 1
      %p85 = scmp.ne.s32.totalorder %s80, %s82
      %p86 = scmp.eq.s32.totalorder %s25, 0
      %p87 = por %p85, %p86
      %p88 = scmp.ne.s32.totalorder %s80, %s82
      %p89 = scmp.eq.s32.totalorder %s30, 1
      %p90 = por %p88, %p89
      %p91 = scmp.ne.s32.totalorder %s82, %s83
      %p92 = scmp.eq.s32.totalorder %s30, 0
      %p93 = por %p91, %p92
      %p94 = scmp.ne.s32.totalorder %s82, %s83
      %p95 = scmp.eq.s32.totalorder %s31, 1
      %p96 = por %p94, %p95
      %p98 = scmp.ne.s32.totalorder %s83, %s97
      %p99 = scmp.eq.s32.totalorder %s31, 0
      %p100 = por %p98, %p99
      %s102 = sadd.s32 %s101, 1
      %p105 = scmp.eq.s32.totalorder %s25, 1
      %p106 = scmp.ne.s32.totalorder %s101, %s103
      %p107 = scmp.eq.s32.totalorder %s25, 0
      %p108 = por %p106, %p107
      %p109 = scmp.ne.s32.totalorder %s101, %s103
      %p110 = scmp.eq.s32.totalorder %s30, 1
      %p111 = por %p109, %p110
      %p112 = scmp.ne.s32.totalorder %s103, %s104
      %p113 = scmp.eq.s32.totalorder %s30, 0
      %p114 = por %p112, %p113
      %p115 = scmp.ne.s32.totalorder %s103, %s104
      %p116 = scmp.eq.s32.totalorder %s31, 1
      %p117 = por %p115, %p116
      %p119 = scmp.ne.s32.totalorder %s104, %s118
      %p120 = scmp.eq.s32.totalorder %s31, 0
      %p121 = por %p119, %p120
      %s123 = sadd.s32 %s122, 1
      %p126 = scmp.eq.s32.totalorder %s25, 1
      %p127 = scmp.ne.s32.totalorder %s122, %s124
      %p128 = scmp.eq.s32.totalorder %s25, 0
      %p129 = por %p127, %p128
      %p130 = scmp.ne.s32.totalorder %s122, %s124
      %p131 = scmp.eq.s32.totalorder %s30, 1
      %p132 = por %p130, %p131
      %p133 = scmp.ne.s32.totalorder %s124, %s125
      %p134 = scmp.eq.s32.totalorder %s30, 0
      %p135 = por %p133, %p134
      %p136 = scmp.ne.s32.totalorder %s124, %s125
      %p137 = scmp.eq.s32.totalorder %s31, 1
      %p138 = por %p136, %p137
      %p140 = scmp.ne.s32.totalorder %s125, %s139
      %p141 = scmp.eq.s32.totalorder %s31, 0
      %p142 = por %p140, %p141
      %s144 = sadd.s32 %s143, 1
      %p147 = scmp.eq.s32.totalorder %s25, 1
      %p148 = scmp.ne.s32.totalorder %s143, %s145
      %p149 = scmp.eq.s32.totalorder %s25, 0
      %p150 = por %p148, %p149
      %p151 = scmp.ne.s32.totalorder %s143, %s145
      %p152 = scmp.eq.s32.totalorder %s30, 1
      %p153 = por %p151, %p152
      %p154 = scmp.ne.s32.totalorder %s145, %s146
      %p155 = scmp.eq.s32.totalorder %s30, 0
      %p156 = por %p154, %p155
      %p157 = scmp.ne.s32.totalorder %s145, %s146
      %p158 = scmp.eq.s32.totalorder %s31, 1
      %p159 = por %p157, %p158
      %p161 = scmp.ne.s32.totalorder %s146, %s160
      %p162 = scmp.eq.s32.totalorder %s31, 0
      %p163 = por %p161, %p162
      %s165 = sadd.s32 %s164, 1
      %p168 = scmp.eq.s32.totalorder %s25, 1
      %p169 = scmp.ne.s32.totalorder %s164, %s166
      %p170 = scmp.eq.s32.totalorder %s25, 0
      %p171 = por %p169, %p170
      %p172 = scmp.ne.s32.totalorder %s164, %s166
      %p173 = scmp.eq.s32.totalorder %s30, 1
      %p174 = por %p172, %p173
      %p175 = scmp.ne.s32.totalorder %s166, %s167
      %p176 = scmp.eq.s32.totalorder %s30, 0
      %p177 = por %p175, %p176
      %p178 = scmp.ne.s32.totalorder %s166, %s167
      %p179 = scmp.eq.s32.totalorder %s31, 1
      %p180 = por %p178, %p179
      %p182 = scmp.ne.s32.totalorder %s167, %s181
      %p183 = scmp.eq.s32.totalorder %s31, 0
      %p184 = por %p182, %p183
      %s186 = sadd.s32 %s185, 1
      %p189 = scmp.eq.s32.totalorder %s25, 1
      %p190 = scmp.ne.s32.totalorder %s185, %s187
      %p191 = scmp.eq.s32.totalorder %s25, 0
      %p192 = por %p190, %p191
      %p193 = scmp.ne.s32.totalorder %s185, %s187
      %p194 = scmp.eq.s32.totalorder %s30, 1
      %p195 = por %p193, %p194
      %p196 = scmp.ne.s32.totalorder %s187, %s188
      %p197 = scmp.eq.s32.totalorder %s30, 0
      %p198 = por %p196, %p197
      %p199 = scmp.ne.s32.totalorder %s187, %s188
      %p200 = scmp.eq.s32.totalorder %s31, 1
      %p201 = por %p199, %p200
      %p203 = scmp.ne.s32.totalorder %s188, %s202
      %p204 = scmp.eq.s32.totalorder %s31, 0
      %p205 = por %p203, %p204
      %s207 = sadd.s32 %s206, 1
      %p210 = scmp.eq.s32.totalorder %s25, 1
      %p211 = scmp.ne.s32.totalorder %s206, %s208
      %p212 = scmp.eq.s32.totalorder %s25, 0
      %p213 = por %p211, %p212
      %p214 = scmp.ne.s32.totalorder %s206, %s208
      %p215 = scmp.eq.s32.totalorder %s30, 1
      %p216 = por %p214, %p215
      %p217 = scmp.ne.s32.totalorder %s208, %s209
      %p218 = scmp.eq.s32.totalorder %s30, 0
      %p219 = por %p217, %p218
      %p220 = scmp.ne.s32.totalorder %s208, %s209
      %p221 = scmp.eq.s32.totalorder %s31, 1
      %p222 = por %p220, %p221
      %p224 = scmp.ne.s32.totalorder %s209, %s223
      %p225 = scmp.eq.s32.totalorder %s31, 0
      %p226 = por %p224, %p225
      %s228 = sadd.s32 %s227, 1
      %p231 = scmp.eq.s32.totalorder %s25, 1
      %p232 = scmp.ne.s32.totalorder %s227, %s229
      %p233 = scmp.eq.s32.totalorder %s25, 0
      %p234 = por %p232, %p233
      %p235 = scmp.ne.s32.totalorder %s227, %s229
      %p236 = scmp.eq.s32.totalorder %s30, 1
      %p237 = por %p235, %p236
      %p238 = scmp.ne.s32.totalorder %s229, %s230
      %p239 = scmp.eq.s32.totalorder %s30, 0
      %p240 = por %p238, %p239
      %p241 = scmp.ne.s32.totalorder %s229, %s230
      %p242 = scmp.eq.s32.totalorder %s31, 1
      %p243 = por %p241, %p242
      %p245 = scmp.ne.s32.totalorder %s230, %s244
      %p246 = scmp.eq.s32.totalorder %s31, 0
      %p247 = por %p245, %p246
      %s248 = ssub.s32 %s25, %s32
      %p249 = scmp.eq.s32.totalorder %s248, 0
      %s251 = sadd.s32 %s250, 1
      %s252 = scalar_select %p249, %s250, %s251
      %p255 = pneg %p249
      %p256 = scmp.eq.s32.totalorder %s25, 1
      %p257 = por %p255, %p256
      %p258 = scmp.ne.s32.totalorder %s250, %s253
      %p259 = scmp.eq.s32.totalorder %s25, 0
      %p260 = por %p258, %p259
      %p261 = scmp.ne.s32.totalorder %s250, %s253
      %p262 = scmp.eq.s32.totalorder %s30, 1
      %p263 = por %p261, %p262
      %p264 = scmp.ne.s32.totalorder %s253, %s254
      %p265 = scmp.eq.s32.totalorder %s30, 0
      %p266 = por %p264, %p265
      %p267 = scmp.ne.s32.totalorder %s253, %s254
      %p268 = scmp.eq.s32.totalorder %s31, 1
      %p269 = por %p267, %p268
      %p271 = scmp.ne.s32.totalorder %s254, %s270
      %p272 = scmp.eq.s32.totalorder %s31, 0
      %p273 = por %p271, %p272
      %p274 = scmp.le.s32.totalorder 1, %s25
      %p275 = scmp.lt.s32.totalorder %s25, 3
      %p276 = pnand %p274, %p275
      %p277 = pneg %p276
      // Predicated region
      $region9: #{tpu_custom_call.1} parent=5 // pred_check
        _
      $region10: #{tpu_custom_call.1} parent=5 // pred_check_branch
        %279 = sbr.rel (%p276) target = $region12
      $region11: #{tpu_custom_call.1} parent=5 // pred_region
        %s280 = ssub.s32 %s25, 1
        // Predicated region
        $region13: #{tpu_custom_call.1} parent=11 // pred_check
          %p281 = pneg %p72
        $region14: #{tpu_custom_call.1} parent=11 // pred_check_branch
          %283 = sbr.rel (%p281) target = $region16
        $region15: #{tpu_custom_call.1} parent=11 // pred_region
          %s285 = ssub.s32 2048, 2048
          %286 = vsyncadd [#allocation6], %s285
          %s287 = sshll.u32 [#allocation5], 4
          %s288 = int_to_ptr.vmem [resolvable:$true] %s287
          %293 = dma.hbm_to_vmem [thread:$0]  %s1, 2048, %s288, [#allocation6], 128, 128, 8
        $region16: #{tpu_custom_call.1} parent=11 // pred_fallthru
          _
        // Predicated region
        $region17: #{tpu_custom_call.1} parent=11 // pred_check
          %p294 = pneg %p93
        $region18: #{tpu_custom_call.1} parent=11 // pred_check_branch
          %296 = sbr.rel (%p294) target = $region20
        $region19: #{tpu_custom_call.1} parent=11 // pred_region
          _
        $region20: #{tpu_custom_call.1} parent=11 // pred_fallthru
          _
        // Predicated region
        $region21: #{tpu_custom_call.1} parent=11 // pred_check
          %p297 = pneg %p114
        $region22: #{tpu_custom_call.1} parent=11 // pred_check_branch
          %299 = sbr.rel (%p297) target = $region24
        $region23: #{tpu_custom_call.1} parent=11 // pred_region
          %s301 = ssub.s32 2048, 2048
          %302 = vsyncadd [#allocation6], %s301
          %s303 = sshll.u32 [#allocation7], 4
          %s304 = int_to_ptr.vmem [resolvable:$true] %s303
          %309 = dma.hbm_to_vmem [thread:$0]  %s3, 2048, %s304, [#allocation6], 128, 128, 8
        $region24: #{tpu_custom_call.1} parent=11 // pred_fallthru
          _
        // Predicated region
        $region25: #{tpu_custom_call.1} parent=11 // pred_check
          %p310 = pneg %p135
        $region26: #{tpu_custom_call.1} parent=11 // pred_check_branch
          %312 = sbr.rel (%p310) target = $region28
        $region27: #{tpu_custom_call.1} parent=11 // pred_region
          _
        $region28: #{tpu_custom_call.1} parent=11 // pred_fallthru
          _
        // Predicated region
        $region29: #{tpu_custom_call.1} parent=11 // pred_check
          %p313 = pneg %p156
        $region30: #{tpu_custom_call.1} parent=11 // pred_check_branch
          %315 = sbr.rel (%p313) target = $region32
        $region31: #{tpu_custom_call.1} parent=11 // pred_region
          %s317 = ssub.s32 2048, 2048
          %318 = vsyncadd [#allocation9], %s317
          %s319 = sshll.u32 [#allocation8], 4
          %s320 = int_to_ptr.vmem [resolvable:$true] %s319
          %325 = dma.hbm_to_vmem [thread:$0]  %s5, 2048, %s320, [#allocation9], 128, 128, 8
        $region32: #{tpu_custom_call.1} parent=11 // pred_fallthru
          _
        // Predicated region
        $region33: #{tpu_custom_call.1} parent=11 // pred_check
          %p326 = pneg %p177
        $region34: #{tpu_custom_call.1} parent=11 // pred_check_branch
          %328 = sbr.rel (%p326) target = $region36
        $region35: #{tpu_custom_call.1} parent=11 // pred_region
          %s330 = ssub.s32 2048, 2048
          %331 = vsyncadd [#allocation9], %s330
          %s332 = sshll.u32 [#allocation10], 4
          %s333 = int_to_ptr.vmem [resolvable:$true] %s332
          %338 = dma.hbm_to_vmem [thread:$0]  %s6, 2048, %s333, [#allocation9], 128, 128, 8
        $region36: #{tpu_custom_call.1} parent=11 // pred_fallthru
          _
        // Predicated region
        $region37: #{tpu_custom_call.1} parent=11 // pred_check
          %p339 = pneg %p198
        $region38: #{tpu_custom_call.1} parent=11 // pred_check_branch
          %341 = sbr.rel (%p339) target = $region40
        $region39: #{tpu_custom_call.1} parent=11 // pred_region
          _
        $region40: #{tpu_custom_call.1} parent=11 // pred_fallthru
          _
        // Predicated region
        $region41: #{tpu_custom_call.1} parent=11 // pred_check
          %p342 = pneg %p219
        $region42: #{tpu_custom_call.1} parent=11 // pred_check_branch
          %344 = sbr.rel (%p342) target = $region44
        $region43: #{tpu_custom_call.1} parent=11 // pred_region
          %s346 = ssub.s32 2048, 2048
          %347 = vsyncadd [#allocation12], %s346
          %s348 = sshll.u32 [#allocation11], 4
          %s349 = int_to_ptr.vmem [resolvable:$true] %s348
          %354 = dma.hbm_to_vmem [thread:$0]  %s8, 2048, %s349, [#allocation12], 128, 128, 8
        $region44: #{tpu_custom_call.1} parent=11 // pred_fallthru
          _
        // Predicated region
        $region45: #{tpu_custom_call.1} parent=11 // pred_check
          %p355 = pneg %p240
        $region46: #{tpu_custom_call.1} parent=11 // pred_check_branch
          %357 = sbr.rel (%p355) target = $region48
        $region47: #{tpu_custom_call.1} parent=11 // pred_region
          _
        $region48: #{tpu_custom_call.1} parent=11 // pred_fallthru
          _
      $region12: #{tpu_custom_call.1} parent=5 // pred_fallthru
        _
      %p358 = scmp.lt.s32.totalorder %s25, 2
      // Predicated region
      $region49: #{tpu_custom_call.1} parent=5 // pred_check
        %p359 = pneg %p358
      $region50: #{tpu_custom_call.1} parent=5 // pred_check_branch
        %361 = sbr.rel (%p359) target = $region52
      $region51: #{tpu_custom_call.1} parent=5 // pred_region
        // Predicated region
        $region53: #{tpu_custom_call.1} parent=51 // pred_check
          %p362 = pneg %p45
        $region54: #{tpu_custom_call.1} parent=51 // pred_check_branch
          %364 = sbr.rel (%p362) target = $region56
        $region55: #{tpu_custom_call.1} parent=51 // pred_region
          %s365 = sand.u32 %s35, 1
          %s366 = scalar_lea.sflag [#allocation3], %s365
          %s367 = sand.u32 %s35, 1
          %s368 = smul.addr %s367, 16
          %s369 = scalar_lea.vmem [#allocation2], %s368
          %s370 = smul.u32 2, %s25
          %s372 = ssub.s32 256, 256
          %373 = vsyncadd %s366, %s372
          %s374 = smul.addr %s370, 128
          %s375 = scalar_lea.hbm %s0, %s374
          %s376 = sshll.u32 %s369, 4
          %s377 = int_to_ptr.vmem [resolvable:$true] %s376
          %382 = dma.hbm_to_vmem [thread:$0]  %s375, 256, %s377, %s366, 128, 128, 8
        $region56: #{tpu_custom_call.1} parent=51 // pred_fallthru
          _
      $region52: #{tpu_custom_call.1} parent=5 // pred_fallthru
        _
      %p383 = scmp.le.s32.totalorder 1, %s25
      %p384 = scmp.lt.s32.totalorder %s25, 3
      %p385 = pnand %p383, %p384
      %p386 = pneg %p385
      // Predicated region
      $region57: #{tpu_custom_call.1} parent=5 // pred_check
        _
      $region58: #{tpu_custom_call.1} parent=5 // pred_check_branch
        %388 = sbr.rel (%p385) target = $region60
      $region59: #{tpu_custom_call.1} parent=5 // pred_region
        %s389 = ssub.s32 %s25, 1
        %s390 = sand.u32 %s38, 1
        %s391 = scalar_lea.sflag [#allocation3], %s390
        %s392 = sand.u32 %s38, 1
        %s393 = smul.addr %s392, 16
        %s394 = scalar_lea.vmem [#allocation2], %s393
        // Predicated region
        $region61: #{tpu_custom_call.1} parent=59 // pred_check
          %p395 = pneg %p51
        $region62: #{tpu_custom_call.1} parent=59 // pred_check_branch
          %397 = sbr.rel (%p395) target = $region64
        $region63: #{tpu_custom_call.1} parent=59 // pred_region
          %398 = dma.done %s391, 256
        $region64: #{tpu_custom_call.1} parent=59 // pred_fallthru
          _
        // Predicated region
        $region65: #{tpu_custom_call.1} parent=59 // pred_check
          %p399 = pneg %p72
        $region66: #{tpu_custom_call.1} parent=59 // pred_check_branch
          %401 = sbr.rel (%p399) target = $region68
        $region67: #{tpu_custom_call.1} parent=59 // pred_region
          %402 = dma.done [#allocation6], 2048
        $region68: #{tpu_custom_call.1} parent=59 // pred_fallthru
          _
        // Predicated region
        $region69: #{tpu_custom_call.1} parent=59 // pred_check
          %p403 = pneg %p114
        $region70: #{tpu_custom_call.1} parent=59 // pred_check_branch
          %405 = sbr.rel (%p403) target = $region72
        $region71: #{tpu_custom_call.1} parent=59 // pred_region
          %406 = dma.done [#allocation6], 2048
        $region72: #{tpu_custom_call.1} parent=59 // pred_fallthru
          _
        // Predicated region
        $region73: #{tpu_custom_call.1} parent=59 // pred_check
          %p407 = pneg %p156
        $region74: #{tpu_custom_call.1} parent=59 // pred_check_branch
          %409 = sbr.rel (%p407) target = $region76
        $region75: #{tpu_custom_call.1} parent=59 // pred_region
          %410 = dma.done [#allocation9], 2048
        $region76: #{tpu_custom_call.1} parent=59 // pred_fallthru
          _
        // Predicated region
        $region77: #{tpu_custom_call.1} parent=59 // pred_check
          %p411 = pneg %p177
        $region78: #{tpu_custom_call.1} parent=59 // pred_check_branch
          %413 = sbr.rel (%p411) target = $region80
        $region79: #{tpu_custom_call.1} parent=59 // pred_region
          %414 = dma.done [#allocation9], 2048
        $region80: #{tpu_custom_call.1} parent=59 // pred_fallthru
          _
        // Predicated region
        $region81: #{tpu_custom_call.1} parent=59 // pred_check
          %p415 = pneg %p219
        $region82: #{tpu_custom_call.1} parent=59 // pred_check_branch
          %417 = sbr.rel (%p415) target = $region84
        $region83: #{tpu_custom_call.1} parent=59 // pred_region
          %418 = dma.done [#allocation12], 2048
        $region84: #{tpu_custom_call.1} parent=59 // pred_fallthru
          _
        %s419 = sand.u32 %s38, 1
        %s420 = scalar_lea.sflag [#allocation3], %s419
        %s421 = sand.u32 %s38, 1
        %s422 = smul.addr %s421, 16
        %s423 = scalar_lea.vmem [#allocation2], %s422
        %p424 = pneg %p51
        %p425 = pneg %p48
        %p426 = pneg %p72
        %p427 = pneg %p69
        %p428 = pneg %p93
        %p429 = pneg %p90
        %p430 = pneg %p114
        %p431 = pneg %p111
        %p432 = pneg %p135
        %p433 = pneg %p132
        %p434 = pneg %p156
        %p435 = pneg %p153
        %p436 = pneg %p177
        %p437 = pneg %p174
        %p438 = pneg %p198
        %p439 = pneg %p195
        %p440 = pneg %p219
        %p441 = pneg %p216
        %p442 = pneg %p240
        %p443 = pneg %p237
        %p444 = pneg %p266
        %p445 = pneg %p263
        %s446 = sand.u32 %s253, 1
        %s447 = scalar_lea.sflag [#allocation4], %s446
        %s448 = sand.u32 %s253, 1
        %s449 = smul.addr %s448, 16
        %s450 = scalar_lea.vmem [#allocation13], %s449
        %s451 = smul.u32 2, %s30
        %s452 = smul.u32 2, %s30
        %v453 = vld [vmem:[%s394] sm:$0xff]
        %v454 = vld [vmem:[%s394 + $0x8] sm:$0xff]
        %v455 = vld [vmem:[#allocation5] sm:$0xff]
        %v456 = vld [vmem:[#allocation5 + $0x8] sm:$0xff]
        %v457 = vld [vmem:[#allocation5 + $0x10] sm:$0xff]
        %v458 = vld [vmem:[#allocation5 + $0x18] sm:$0xff]
        %v459 = vld [vmem:[#allocation5 + $0x20] sm:$0xff]
        %v460 = vld [vmem:[#allocation5 + $0x28] sm:$0xff]
        %v461 = vld [vmem:[#allocation5 + $0x30] sm:$0xff]
        %v462 = vld [vmem:[#allocation5 + $0x38] sm:$0xff]
        %v463 = vld [vmem:[#allocation5 + $0x40] sm:$0xff]
        %v464 = vld [vmem:[#allocation5 + $0x48] sm:$0xff]
        %v465 = vld [vmem:[#allocation5 + $0x50] sm:$0xff]
        %v466 = vld [vmem:[#allocation5 + $0x58] sm:$0xff]
        %v467 = vld [vmem:[#allocation5 + $0x60] sm:$0xff]
        %v468 = vld [vmem:[#allocation5 + $0x68] sm:$0xff]
        %v469 = vld [vmem:[#allocation5 + $0x70] sm:$0xff]
        %v470 = vld [vmem:[#allocation5 + $0x78] sm:$0xff]
        %v471 = vld [vmem:[%s2] sm:$0x1]
        %v473 = vlaneseq
        %v474 = vshrl.u32 %v473, 7
        %v475 = vsub.s32 0, %v474
        %v476 = vrot.slane %v471, %v475
        %478 = vmatprep.subr.mxu0 0.0
        %479 = vmatpush1.msra.mxu0 %v455
        %480 = vmatprep.subr.mxu0 0.0
        %481 = vmatpush1.msra.mxu0 %v456
        %482 = vmatprep.subr.mxu0 0.0
        %483 = vmatpush1.msra.mxu0 %v457
        %484 = vmatprep.subr.mxu0 0.0
        %485 = vmatpush1.msra.mxu0 %v458
        %486 = vmatprep.subr.mxu0 0.0
        %487 = vmatpush1.msra.mxu0 %v459
        %488 = vmatprep.subr.mxu0 0.0
        %489 = vmatpush1.msra.mxu0 %v460
        %490 = vmatprep.subr.mxu0 0.0
        %491 = vmatpush1.msra.mxu0 %v461
        %492 = vmatprep.subr.mxu0 0.0
        %493 = vmatpush1.msra.mxu0 %v462
        %494 = vmatprep.subr.mxu0 0.0
        %495 = vmatpush1.msra.mxu0 %v463
        %496 = vmatprep.subr.mxu0 0.0
        %497 = vmatpush1.msra.mxu0 %v464
        %498 = vmatprep.subr.mxu0 0.0
        %499 = vmatpush1.msra.mxu0 %v465
        %500 = vmatprep.subr.mxu0 0.0
        %501 = vmatpush1.msra.mxu0 %v466
        %502 = vmatprep.subr.mxu0 0.0
        %503 = vmatpush1.msra.mxu0 %v467
        %504 = vmatprep.subr.mxu0 0.0
        %505 = vmatpush1.msra.mxu0 %v468
        %506 = vmatprep.subr.mxu0 0.0
        %507 = vmatpush1.msra.mxu0 %v469
        %508 = vmatprep.subr.mxu0 0.0
        %509 = vmatpush1.msra.mxu0 %v470
        %510 = vmatprep.subr.mxu0 0.0
        %511 = vmatpush1.msra.mxu0 0.0
        %512 = vmatprep.subr.mxu0 0.0
        %513 = vmatpush1.msra.mxu0 0.0
        %514 = vmatprep.subr.mxu0 0.0
        %515 = vmatpush1.msra.mxu0 0.0
        %516 = vmatprep.subr.mxu0 0.0
        %517 = vmatpush1.msra.mxu0 0.0
        %518 = vmatprep.subr.mxu0 0.0
        %519 = vmatpush1.msra.mxu0 0.0
        %520 = vmatprep.subr.mxu0 0.0
        %521 = vmatpush1.msra.mxu0 0.0
        %522 = vmatprep.subr.mxu0 0.0
        %523 = vmatpush1.msra.mxu0 0.0
        %524 = vmatprep.subr.mxu0 0.0
        %525 = vmatpush1.msra.mxu0 0.0
        %526 = vmatprep.subr.mxu0 0.0
        %527 = vmatpush1.msra.mxu0 0.0
        %528 = vmatprep.subr.mxu0 0.0
        %529 = vmatpush1.msra.mxu0 0.0
        %530 = vmatprep.subr.mxu0 0.0
        %531 = vmatpush1.msra.mxu0 0.0
        %532 = vmatprep.subr.mxu0 0.0
        %533 = vmatpush1.msra.mxu0 0.0
        %534 = vmatprep.subr.mxu0 0.0
        %535 = vmatpush1.msra.mxu0 0.0
        %536 = vmatprep.subr.mxu0 0.0
        %537 = vmatpush1.msra.mxu0 0.0
        %538 = vmatprep.subr.mxu0 0.0
        %539 = vmatpush1.msra.mxu0 0.0
        %540 = vmatprep.subr.mxu0 0.0
        %541 = vmatpush1.msra.mxu0 0.0
        %542 = vmatprep.mubr.f32.mxu0 0.0
        %543 = vmatmul.mubr.f32.gmra.mrb[0].mxu0 %v453
        %v544 = vpop.f32.mrb[0].mxu0
        %v545 = vadd.f32 %v476, %v544
        %v546 = vpop.f32.mrb[0].mxu0
        %547 = vmatprep.mubr.f32.mxu0 0.0
        %548 = vmatmul.mubr.f32.gmra.mrb[0].mxu0 %v454
        %v549 = vpop.f32.mrb[0].mxu0
        %v550 = vadd.f32 %v476, %v549
        %v551 = vpop.f32.mrb[0].mxu0
        %552 = vdwg.mxu0
        %v553 = vmul.f32 %v545, 0.5
        %v554 = vmul.f32 %v550, 0.5
        %v555 = vmul.f32 %v545, 0.044715
        %v556 = vmul.f32 %v550, 0.044715
        %v557 = vmul.f32 %v555, %v545
        %v558 = vmul.f32 %v556, %v550
        %v559 = vmul.f32 %v557, %v545
        %v560 = vmul.f32 %v558, %v550
        %v561 = vadd.f32 %v545, %v559
        %v562 = vadd.f32 %v550, %v560
        %v563 = vmul.f32 %v561, 0.7978846
        %v564 = vmul.f32 %v562, 0.7978846
        %v565 = vtanh.pop %v563
        %v566 = vtanh.pop %v564
        %v567 = vadd.f32 %v565, 1.0
        %v568 = vadd.f32 %v566, 1.0
        %v569 = vmul.f32 %v553, %v567
        %v570 = vmul.f32 %v554, %v568
        %v571 = vld [vmem:[#allocation7] sm:$0xff]
        %v572 = vld [vmem:[#allocation7 + $0x8] sm:$0xff]
        %v573 = vld [vmem:[#allocation7 + $0x10] sm:$0xff]
        %v574 = vld [vmem:[#allocation7 + $0x18] sm:$0xff]
        %v575 = vld [vmem:[#allocation7 + $0x20] sm:$0xff]
        %v576 = vld [vmem:[#allocation7 + $0x28] sm:$0xff]
        %v577 = vld [vmem:[#allocation7 + $0x30] sm:$0xff]
        %v578 = vld [vmem:[#allocation7 + $0x38] sm:$0xff]
        %v579 = vld [vmem:[#allocation7 + $0x40] sm:$0xff]
        %v580 = vld [vmem:[#allocation7 + $0x48] sm:$0xff]
        %v581 = vld [vmem:[#allocation7 + $0x50] sm:$0xff]
        %v582 = vld [vmem:[#allocation7 + $0x58] sm:$0xff]
        %v583 = vld [vmem:[#allocation7 + $0x60] sm:$0xff]
        %v584 = vld [vmem:[#allocation7 + $0x68] sm:$0xff]
        %v585 = vld [vmem:[#allocation7 + $0x70] sm:$0xff]
        %v586 = vld [vmem:[#allocation7 + $0x78] sm:$0xff]
        %v587 = vld [vmem:[%s4] sm:$0x1]
        %v589 = vlaneseq
        %v590 = vshrl.u32 %v589, 7
        %v591 = vsub.s32 0, %v590
        %v592 = vrot.slane %v587, %v591
        %594 = vmatprep.subr.mxu0 0.0
        %595 = vmatpush1.msra.mxu0 %v571
        %596 = vmatprep.subr.mxu0 0.0
        %597 = vmatpush1.msra.mxu0 %v572
        %598 = vmatprep.subr.mxu0 0.0
        %599 = vmatpush1.msra.mxu0 %v573
        %600 = vmatprep.subr.mxu0 0.0
        %601 = vmatpush1.msra.mxu0 %v574
        %602 = vmatprep.subr.mxu0 0.0
        %603 = vmatpush1.msra.mxu0 %v575
        %604 = vmatprep.subr.mxu0 0.0
        %605 = vmatpush1.msra.mxu0 %v576
        %606 = vmatprep.subr.mxu0 0.0
        %607 = vmatpush1.msra.mxu0 %v577
        %608 = vmatprep.subr.mxu0 0.0
        %609 = vmatpush1.msra.mxu0 %v578
        %610 = vmatprep.subr.mxu0 0.0
        %611 = vmatpush1.msra.mxu0 %v579
        %612 = vmatprep.subr.mxu0 0.0
        %613 = vmatpush1.msra.mxu0 %v580
        %614 = vmatprep.subr.mxu0 0.0
        %615 = vmatpush1.msra.mxu0 %v581
        %616 = vmatprep.subr.mxu0 0.0
        %617 = vmatpush1.msra.mxu0 %v582
        %618 = vmatprep.subr.mxu0 0.0
        %619 = vmatpush1.msra.mxu0 %v583
        %620 = vmatprep.subr.mxu0 0.0
        %621 = vmatpush1.msra.mxu0 %v584
        %622 = vmatprep.subr.mxu0 0.0
        %623 = vmatpush1.msra.mxu0 %v585
        %624 = vmatprep.subr.mxu0 0.0
        %625 = vmatpush1.msra.mxu0 %v586
        %626 = vmatprep.subr.mxu0 0.0
        %627 = vmatpush1.msra.mxu0 0.0
        %628 = vmatprep.subr.mxu0 0.0
        %629 = vmatpush1.msra.mxu0 0.0
        %630 = vmatprep.subr.mxu0 0.0
        %631 = vmatpush1.msra.mxu0 0.0
        %632 = vmatprep.subr.mxu0 0.0
        %633 = vmatpush1.msra.mxu0 0.0
        %634 = vmatprep.subr.mxu0 0.0
        %635 = vmatpush1.msra.mxu0 0.0
        %636 = vmatprep.subr.mxu0 0.0
        %637 = vmatpush1.msra.mxu0 0.0
        %638 = vmatprep.subr.mxu0 0.0
        %639 = vmatpush1.msra.mxu0 0.0
        %640 = vmatprep.subr.mxu0 0.0
        %641 = vmatpush1.msra.mxu0 0.0
        %642 = vmatprep.subr.mxu0 0.0
        %643 = vmatpush1.msra.mxu0 0.0
        %644 = vmatprep.subr.mxu0 0.0
        %645 = vmatpush1.msra.mxu0 0.0
        %646 = vmatprep.subr.mxu0 0.0
        %647 = vmatpush1.msra.mxu0 0.0
        %648 = vmatprep.subr.mxu0 0.0
        %649 = vmatpush1.msra.mxu0 0.0
        %650 = vmatprep.subr.mxu0 0.0
        %651 = vmatpush1.msra.mxu0 0.0
        %652 = vmatprep.subr.mxu0 0.0
        %653 = vmatpush1.msra.mxu0 0.0
        %654 = vmatprep.subr.mxu0 0.0
        %655 = vmatpush1.msra.mxu0 0.0
        %656 = vmatprep.subr.mxu0 0.0
        %657 = vmatpush1.msra.mxu0 0.0
        %658 = vmatprep.mubr.f32.mxu0 0.0
        %659 = vmatmul.mubr.f32.gmra.mrb[0].mxu0 %v569
        %v660 = vpop.f32.mrb[0].mxu0
        %v661 = vadd.f32 %v592, %v660
        %v662 = vpop.f32.mrb[0].mxu0
        %663 = vmatprep.mubr.f32.mxu0 0.0
        %664 = vmatmul.mubr.f32.gmra.mrb[0].mxu0 %v570
        %v665 = vpop.f32.mrb[0].mxu0
        %v666 = vadd.f32 %v592, %v665
        %v667 = vpop.f32.mrb[0].mxu0
        %668 = vdwg.mxu0
        %v669 = vrot.slane %v661, 4
        %v670 = vmax.f32 %v661, %v669
        %v671 = vrot.slane %v670, 2
        %v672 = vmax.f32 %v670, %v671
        %v673 = vrot.slane %v672, 1
        %v674 = vmax.f32 %v672, %v673
        %v675 = vrot.slane %v666, 4
        %v676 = vmax.f32 %v666, %v675
        %v677 = vrot.slane %v676, 2
        %v678 = vmax.f32 %v676, %v677
        %v679 = vrot.slane %v678, 1
        %v680 = vmax.f32 %v678, %v679
        %v681 = vsub.f32 %v661, %v674
        %v682 = vsub.f32 %v666, %v680
        %v683 = vmul.f32 %v681, 1.442695
        %v684 = vpow.pop %v683
        %v685 = vmul.f32 %v682, 1.442695
        %v686 = vpow.pop %v685
        %v687 = vrot.slane %v684, 4
        %v688 = vadd.f32 %v684, %v687
        %v689 = vrot.slane %v688, 2
        %v690 = vadd.f32 %v688, %v689
        %v691 = vrot.slane %v690, 1
        %v692 = vadd.f32 %v690, %v691
        %v693 = vrot.slane %v686, 4
        %v694 = vadd.f32 %v686, %v693
        %v695 = vrot.slane %v694, 2
        %v696 = vadd.f32 %v694, %v695
        %v697 = vrot.slane %v696, 1
        %v698 = vadd.f32 %v696, %v697
        %v699 = vmul.f32 %v661, %v684
        %v700 = vmul.f32 %v666, %v686
        %v701 = vrot.slane %v699, 4
        %v702 = vadd.f32 %v699, %v701
        %v703 = vrot.slane %v702, 2
        %v704 = vadd.f32 %v702, %v703
        %v705 = vrot.slane %v704, 1
        %v706 = vadd.f32 %v704, %v705
        %v707 = vrot.slane %v700, 4
        %v708 = vadd.f32 %v700, %v707
        %v709 = vrot.slane %v708, 2
        %v710 = vadd.f32 %v708, %v709
        %v711 = vrot.slane %v710, 1
        %v712 = vadd.f32 %v710, %v711
        %v713 = vrcp.pop %v692
        %v714 = vrcp.pop %v698
        %v715 = vmul.f32 %v706, %v713
        %v716 = vmul.f32 %v712, %v714
        %v717 = vld [vmem:[#allocation10] sm:$0xff]
        %v718 = vld [vmem:[#allocation10 + $0x8] sm:$0xff]
        %v719 = vld [vmem:[#allocation10 + $0x10] sm:$0xff]
        %v720 = vld [vmem:[#allocation10 + $0x18] sm:$0xff]
        %v721 = vld [vmem:[#allocation10 + $0x20] sm:$0xff]
        %v722 = vld [vmem:[#allocation10 + $0x28] sm:$0xff]
        %v723 = vld [vmem:[#allocation10 + $0x30] sm:$0xff]
        %v724 = vld [vmem:[#allocation10 + $0x38] sm:$0xff]
        %v725 = vld [vmem:[#allocation10 + $0x40] sm:$0xff]
        %v726 = vld [vmem:[#allocation10 + $0x48] sm:$0xff]
        %v727 = vld [vmem:[#allocation10 + $0x50] sm:$0xff]
        %v728 = vld [vmem:[#allocation10 + $0x58] sm:$0xff]
        %v729 = vld [vmem:[#allocation10 + $0x60] sm:$0xff]
        %v730 = vld [vmem:[#allocation10 + $0x68] sm:$0xff]
        %v731 = vld [vmem:[#allocation10 + $0x70] sm:$0xff]
        %v732 = vld [vmem:[#allocation10 + $0x78] sm:$0xff]
        %v733 = vld [vmem:[%s7] sm:$0x1]
        %v735 = vlaneseq
        %v736 = vshrl.u32 %v735, 7
        %v737 = vsub.s32 0, %v736
        %v738 = vrot.slane %v733, %v737
        %vm742 = vcmask 1041409
        %v743 = vsel %vm742, %v716, %v715
        %745 = vmatprep.subr.mxu0 0.0
        %746 = vmatpush1.msra.mxu0 %v717
        %747 = vmatprep.subr.mxu0 0.0
        %748 = vmatpush1.msra.mxu0 %v718
        %749 = vmatprep.subr.mxu0 0.0
        %750 = vmatpush1.msra.mxu0 %v719
        %751 = vmatprep.subr.mxu0 0.0
        %752 = vmatpush1.msra.mxu0 %v720
        %753 = vmatprep.subr.mxu0 0.0
        %754 = vmatpush1.msra.mxu0 %v721
        %755 = vmatprep.subr.mxu0 0.0
        %756 = vmatpush1.msra.mxu0 %v722
        %757 = vmatprep.subr.mxu0 0.0
        %758 = vmatpush1.msra.mxu0 %v723
        %759 = vmatprep.subr.mxu0 0.0
        %760 = vmatpush1.msra.mxu0 %v724
        %761 = vmatprep.subr.mxu0 0.0
        %762 = vmatpush1.msra.mxu0 %v725
        %763 = vmatprep.subr.mxu0 0.0
        %764 = vmatpush1.msra.mxu0 %v726
        %765 = vmatprep.subr.mxu0 0.0
        %766 = vmatpush1.msra.mxu0 %v727
        %767 = vmatprep.subr.mxu0 0.0
        %768 = vmatpush1.msra.mxu0 %v728
        %769 = vmatprep.subr.mxu0 0.0
        %770 = vmatpush1.msra.mxu0 %v729
        %771 = vmatprep.subr.mxu0 0.0
        %772 = vmatpush1.msra.mxu0 %v730
        %773 = vmatprep.subr.mxu0 0.0
        %774 = vmatpush1.msra.mxu0 %v731
        %775 = vmatprep.subr.mxu0 0.0
        %776 = vmatpush1.msra.mxu0 %v732
        %777 = vmatprep.subr.mxu0 0.0
        %778 = vmatpush1.msra.mxu0 0.0
        %779 = vmatprep.subr.mxu0 0.0
        %780 = vmatpush1.msra.mxu0 0.0
        %781 = vmatprep.subr.mxu0 0.0
        %782 = vmatpush1.msra.mxu0 0.0
        %783 = vmatprep.subr.mxu0 0.0
        %784 = vmatpush1.msra.mxu0 0.0
        %785 = vmatprep.subr.mxu0 0.0
        %786 = vmatpush1.msra.mxu0 0.0
        %787 = vmatprep.subr.mxu0 0.0
        %788 = vmatpush1.msra.mxu0 0.0
        %789 = vmatprep.subr.mxu0 0.0
        %790 = vmatpush1.msra.mxu0 0.0
        %791 = vmatprep.subr.mxu0 0.0
        %792 = vmatpush1.msra.mxu0 0.0
        %793 = vmatprep.subr.mxu0 0.0
        %794 = vmatpush1.msra.mxu0 0.0
        %795 = vmatprep.subr.mxu0 0.0
        %796 = vmatpush1.msra.mxu0 0.0
        %797 = vmatprep.subr.mxu0 0.0
        %798 = vmatpush1.msra.mxu0 0.0
        %799 = vmatprep.subr.mxu0 0.0
        %800 = vmatpush1.msra.mxu0 0.0
        %801 = vmatprep.subr.mxu0 0.0
        %802 = vmatpush1.msra.mxu0 0.0
        %803 = vmatprep.subr.mxu0 0.0
        %804 = vmatpush1.msra.mxu0 0.0
        %805 = vmatprep.subr.mxu0 0.0
        %806 = vmatpush1.msra.mxu0 0.0
        %807 = vmatprep.subr.mxu0 0.0
        %808 = vmatpush1.msra.mxu0 0.0
        %809 = vmatprep.mubr.f32.mxu0 0.0
        %810 = vmatmul.mubr.f32.gmra.mrb[0].mxu0 %v743
        %v811 = vpop.f32.mrb[0].mxu0
        %v812 = vadd.f32 %v738, %v811
        %v813 = vpop.f32.mrb[0].mxu0
        %814 = vdwg.mxu0
        %v815 = vld [vmem:[#allocation8] sm:$0xff]
        %v816 = vld [vmem:[#allocation8 + $0x8] sm:$0xff]
        %v817 = vld [vmem:[#allocation8 + $0x10] sm:$0xff]
        %v818 = vld [vmem:[#allocation8 + $0x18] sm:$0xff]
        %v819 = vld [vmem:[#allocation8 + $0x20] sm:$0xff]
        %v820 = vld [vmem:[#allocation8 + $0x28] sm:$0xff]
        %v821 = vld [vmem:[#allocation8 + $0x30] sm:$0xff]
        %v822 = vld [vmem:[#allocation8 + $0x38] sm:$0xff]
        %v823 = vld [vmem:[#allocation8 + $0x40] sm:$0xff]
        %v824 = vld [vmem:[#allocation8 + $0x48] sm:$0xff]
        %v825 = vld [vmem:[#allocation8 + $0x50] sm:$0xff]
        %v826 = vld [vmem:[#allocation8 + $0x58] sm:$0xff]
        %v827 = vld [vmem:[#allocation8 + $0x60] sm:$0xff]
        %v828 = vld [vmem:[#allocation8 + $0x68] sm:$0xff]
        %v829 = vld [vmem:[#allocation8 + $0x70] sm:$0xff]
        %v830 = vld [vmem:[#allocation8 + $0x78] sm:$0xff]
        %831 = vmatprep.subr.mxu0 0.0
        %832 = vmatpush1.msra.mxu0 %v815
        %833 = vmatprep.subr.mxu0 0.0
        %834 = vmatpush1.msra.mxu0 %v816
        %835 = vmatprep.subr.mxu0 0.0
        %836 = vmatpush1.msra.mxu0 %v817
        %837 = vmatprep.subr.mxu0 0.0
        %838 = vmatpush1.msra.mxu0 %v818
        %839 = vmatprep.subr.mxu0 0.0
        %840 = vmatpush1.msra.mxu0 %v819
        %841 = vmatprep.subr.mxu0 0.0
        %842 = vmatpush1.msra.mxu0 %v820
        %843 = vmatprep.subr.mxu0 0.0
        %844 = vmatpush1.msra.mxu0 %v821
        %845 = vmatprep.subr.mxu0 0.0
        %846 = vmatpush1.msra.mxu0 %v822
        %847 = vmatprep.subr.mxu0 0.0
        %848 = vmatpush1.msra.mxu0 %v823
        %849 = vmatprep.subr.mxu0 0.0
        %850 = vmatpush1.msra.mxu0 %v824
        %851 = vmatprep.subr.mxu0 0.0
        %852 = vmatpush1.msra.mxu0 %v825
        %853 = vmatprep.subr.mxu0 0.0
        %854 = vmatpush1.msra.mxu0 %v826
        %855 = vmatprep.subr.mxu0 0.0
        %856 = vmatpush1.msra.mxu0 %v827
        %857 = vmatprep.subr.mxu0 0.0
        %858 = vmatpush1.msra.mxu0 %v828
        %859 = vmatprep.subr.mxu0 0.0
        %860 = vmatpush1.msra.mxu0 %v829
        %861 = vmatprep.subr.mxu0 0.0
        %862 = vmatpush1.msra.mxu0 %v830
        %863 = vmatprep.subr.mxu0 0.0
        %864 = vmatpush1.msra.mxu0 0.0
        %865 = vmatprep.subr.mxu0 0.0
        %866 = vmatpush1.msra.mxu0 0.0
        %867 = vmatprep.subr.mxu0 0.0
        %868 = vmatpush1.msra.mxu0 0.0
        %869 = vmatprep.subr.mxu0 0.0
        %870 = vmatpush1.msra.mxu0 0.0
        %871 = vmatprep.subr.mxu0 0.0
        %872 = vmatpush1.msra.mxu0 0.0
        %873 = vmatprep.subr.mxu0 0.0
        %874 = vmatpush1.msra.mxu0 0.0
        %875 = vmatprep.subr.mxu0 0.0
        %876 = vmatpush1.msra.mxu0 0.0
        %877 = vmatprep.subr.mxu0 0.0
        %878 = vmatpush1.msra.mxu0 0.0
        %879 = vmatprep.subr.mxu0 0.0
        %880 = vmatpush1.msra.mxu0 0.0
        %881 = vmatprep.subr.mxu0 0.0
        %882 = vmatpush1.msra.mxu0 0.0
        %883 = vmatprep.subr.mxu0 0.0
        %884 = vmatpush1.msra.mxu0 0.0
        %885 = vmatprep.subr.mxu0 0.0
        %886 = vmatpush1.msra.mxu0 0.0
        %887 = vmatprep.subr.mxu0 0.0
        %888 = vmatpush1.msra.mxu0 0.0
        %889 = vmatprep.subr.mxu0 0.0
        %890 = vmatpush1.msra.mxu0 0.0
        %891 = vmatprep.subr.mxu0 0.0
        %892 = vmatpush1.msra.mxu0 0.0
        %893 = vmatprep.subr.mxu0 0.0
        %894 = vmatpush1.msra.mxu0 0.0
        %895 = vmatprep.mubr.f32.mxu0 0.0
        %896 = vmatmul.mubr.f32.gmra.mrb[0].mxu0 %v453
        %v897 = vpop.f32.mrb[0].mxu0
        %v898 = vadd.f32 0.0, %v897
        %v899 = vpop.f32.mrb[0].mxu0
        %900 = vmatprep.mubr.f32.mxu0 0.0
        %901 = vmatmul.mubr.f32.gmra.mrb[0].mxu0 %v454
        %v902 = vpop.f32.mrb[0].mxu0
        %v903 = vadd.f32 0.0, %v902
        %v904 = vpop.f32.mrb[0].mxu0
        %905 = vdwg.mxu0
        %v908 = vunpack.c.l.s4 1966171168
        %v909 = vunpack.c.0.s8 %v908
        %v910 = vlaneseq
        %v911 = vshrl.u32 %v910, 7
        %v912 = vsub.s32 %v909, %v911
        %v913 = vrot.slane %v812, %v912
        %v914 = vcombine.high %v913, %v913
        %v916 = vunpack.c.l.s4 1966171168
        %v917 = vunpack.c.0.s8 %v916
        %v918 = vlaneseq
        %v919 = vshrl.u32 %v918, 7
        %v920 = vsub.s32 %v917, %v919
        %v921 = vrot.slane %v913, %v920
        %v923 = vunpack.c.l.s4 1966171168
        %v924 = vunpack.c.0.s8 %v923
        %v925 = vlaneseq
        %v926 = vshrl.u32 %v925, 7
        %v927 = vsub.s32 %v924, %v926
        %v928 = vrot.slane %v914, %v927
        %v929 = vlaneseq
        %v930 = vshrl.u32 %v929, 7
        %v931 = vsub.s32 0, %v930
        %v932 = vrot.slane %v921, %v931
        %v933 = vlaneseq
        %v934 = vshrl.u32 %v933, 7
        %v935 = vsub.s32 0, %v934
        %v936 = vrot.slane %v928, %v935
        %v939 = vadd.f32 %v898, %v932
        %v940 = vadd.f32 %v903, %v936
        %v941 = vmul.f32 %v939, 0.5
        %v942 = vmul.f32 %v940, 0.5
        %v943 = vmul.f32 %v939, 0.044715
        %v944 = vmul.f32 %v940, 0.044715
        %v945 = vmul.f32 %v943, %v939
        %v946 = vmul.f32 %v944, %v940
        %v947 = vmul.f32 %v945, %v939
        %v948 = vmul.f32 %v946, %v940
        %v949 = vadd.f32 %v939, %v947
        %v950 = vadd.f32 %v940, %v948
        %v951 = vmul.f32 %v949, 0.7978846
        %v952 = vmul.f32 %v950, 0.7978846
        %v953 = vtanh.pop %v951
        %v954 = vtanh.pop %v952
        %v955 = vadd.f32 %v953, 1.0
        %v956 = vadd.f32 %v954, 1.0
        %v957 = vmul.f32 %v941, %v955
        %v958 = vmul.f32 %v942, %v956
        %v959 = vld [vmem:[#allocation11] sm:$0xff]
        %v960 = vld [vmem:[#allocation11 + $0x8] sm:$0xff]
        %v961 = vld [vmem:[#allocation11 + $0x10] sm:$0xff]
        %v962 = vld [vmem:[#allocation11 + $0x18] sm:$0xff]
        %v963 = vld [vmem:[#allocation11 + $0x20] sm:$0xff]
        %v964 = vld [vmem:[#allocation11 + $0x28] sm:$0xff]
        %v965 = vld [vmem:[#allocation11 + $0x30] sm:$0xff]
        %v966 = vld [vmem:[#allocation11 + $0x38] sm:$0xff]
        %v967 = vld [vmem:[#allocation11 + $0x40] sm:$0xff]
        %v968 = vld [vmem:[#allocation11 + $0x48] sm:$0xff]
        %v969 = vld [vmem:[#allocation11 + $0x50] sm:$0xff]
        %v970 = vld [vmem:[#allocation11 + $0x58] sm:$0xff]
        %v971 = vld [vmem:[#allocation11 + $0x60] sm:$0xff]
        %v972 = vld [vmem:[#allocation11 + $0x68] sm:$0xff]
        %v973 = vld [vmem:[#allocation11 + $0x70] sm:$0xff]
        %v974 = vld [vmem:[#allocation11 + $0x78] sm:$0xff]
        %v975 = vld [vmem:[%s9] sm:$0x1]
        %v977 = vlaneseq
        %v978 = vshrl.u32 %v977, 7
        %v979 = vsub.s32 0, %v978
        %v980 = vrot.slane %v975, %v979
        %982 = vmatprep.subr.mxu0 0.0
        %983 = vmatpush1.msra.mxu0 %v959
        %984 = vmatprep.subr.mxu0 0.0
        %985 = vmatpush1.msra.mxu0 %v960
        %986 = vmatprep.subr.mxu0 0.0
        %987 = vmatpush1.msra.mxu0 %v961
        %988 = vmatprep.subr.mxu0 0.0
        %989 = vmatpush1.msra.mxu0 %v962
        %990 = vmatprep.subr.mxu0 0.0
        %991 = vmatpush1.msra.mxu0 %v963
        %992 = vmatprep.subr.mxu0 0.0
        %993 = vmatpush1.msra.mxu0 %v964
        %994 = vmatprep.subr.mxu0 0.0
        %995 = vmatpush1.msra.mxu0 %v965
        %996 = vmatprep.subr.mxu0 0.0
        %997 = vmatpush1.msra.mxu0 %v966
        %998 = vmatprep.subr.mxu0 0.0
        %999 = vmatpush1.msra.mxu0 %v967
        %1000 = vmatprep.subr.mxu0 0.0
        %1001 = vmatpush1.msra.mxu0 %v968
        %1002 = vmatprep.subr.mxu0 0.0
        %1003 = vmatpush1.msra.mxu0 %v969
        %1004 = vmatprep.subr.mxu0 0.0
        %1005 = vmatpush1.msra.mxu0 %v970
        %1006 = vmatprep.subr.mxu0 0.0
        %1007 = vmatpush1.msra.mxu0 %v971
        %1008 = vmatprep.subr.mxu0 0.0
        %1009 = vmatpush1.msra.mxu0 %v972
        %1010 = vmatprep.subr.mxu0 0.0
        %1011 = vmatpush1.msra.mxu0 %v973
        %1012 = vmatprep.subr.mxu0 0.0
        %1013 = vmatpush1.msra.mxu0 %v974
        %1014 = vmatprep.subr.mxu0 0.0
        %1015 = vmatpush1.msra.mxu0 0.0
        %1016 = vmatprep.subr.mxu0 0.0
        %1017 = vmatpush1.msra.mxu0 0.0
        %1018 = vmatprep.subr.mxu0 0.0
        %1019 = vmatpush1.msra.mxu0 0.0
        %1020 = vmatprep.subr.mxu0 0.0
        %1021 = vmatpush1.msra.mxu0 0.0
        %1022 = vmatprep.subr.mxu0 0.0
        %1023 = vmatpush1.msra.mxu0 0.0
        %1024 = vmatprep.subr.mxu0 0.0
        %1025 = vmatpush1.msra.mxu0 0.0
        %1026 = vmatprep.subr.mxu0 0.0
        %1027 = vmatpush1.msra.mxu0 0.0
        %1028 = vmatprep.subr.mxu0 0.0
        %1029 = vmatpush1.msra.mxu0 0.0
        %1030 = vmatprep.subr.mxu0 0.0
        %1031 = vmatpush1.msra.mxu0 0.0
        %1032 = vmatprep.subr.mxu0 0.0
        %1033 = vmatpush1.msra.mxu0 0.0
        %1034 = vmatprep.subr.mxu0 0.0
        %1035 = vmatpush1.msra.mxu0 0.0
        %1036 = vmatprep.subr.mxu0 0.0
        %1037 = vmatpush1.msra.mxu0 0.0
        %1038 = vmatprep.subr.mxu0 0.0
        %1039 = vmatpush1.msra.mxu0 0.0
        %1040 = vmatprep.subr.mxu0 0.0
        %1041 = vmatpush1.msra.mxu0 0.0
        %1042 = vmatprep.subr.mxu0 0.0
        %1043 = vmatpush1.msra.mxu0 0.0
        %1044 = vmatprep.subr.mxu0 0.0
        %1045 = vmatpush1.msra.mxu0 0.0
        %1046 = vmatprep.mubr.f32.mxu0 0.0
        %1047 = vmatmul.mubr.f32.gmra.mrb[0].mxu0 %v957
        %v1048 = vpop.f32.mrb[0].mxu0
        %v1049 = vadd.f32 %v980, %v1048
        %v1050 = vpop.f32.mrb[0].mxu0
        %1051 = vmatprep.mubr.f32.mxu0 0.0
        %1052 = vmatmul.mubr.f32.gmra.mrb[0].mxu0 %v958
        %v1053 = vpop.f32.mrb[0].mxu0
        %v1054 = vadd.f32 %v980, %v1053
        %v1055 = vpop.f32.mrb[0].mxu0
        %1056 = vdwg.mxu0
        %1057 = vst [vmem:[%s450] sm:$0xff] %v1049
        %1058 = vst [vmem:[%s450 + $0x8] sm:$0xff] %v1054
        %s1059 = sand.u32 %s253, 1
        %s1060 = scalar_lea.sflag [#allocation4], %s1059
        %s1061 = sand.u32 %s253, 1
        %s1062 = smul.addr %s1061, 16
        %s1063 = scalar_lea.vmem [#allocation13], %s1062
        // Predicated region
        $region85: #{tpu_custom_call.1} parent=59 // pred_check
          %p1064 = pneg %p263
        $region86: #{tpu_custom_call.1} parent=59 // pred_check_branch
          %1066 = sbr.rel (%p1064) target = $region88
        $region87: #{tpu_custom_call.1} parent=59 // pred_region
          %s1067 = smul.u32 2, %s30
          %s1069 = ssub.s32 256, 256
          %1070 = vsyncadd %s1060, %s1069
          %s1071 = smul.addr %s1067, 128
          %s1072 = scalar_lea.hbm %s10, %s1071
          %s1073 = sshll.u32 %s1063, 4
          %s1074 = int_to_ptr.vmem [resolvable:$true] %s1073
          %1079 = dma.vmem_to_hbm [thread:$0]  %s1074, 256, %s1072, %s1060, 128, 128, 8
        $region88: #{tpu_custom_call.1} parent=59 // pred_fallthru
          _
      $region60: #{tpu_custom_call.1} parent=5 // pred_fallthru
        _
      %p1080 = scmp.le.s32.totalorder 2, %s25
      // Predicated region
      $region89: #{tpu_custom_call.1} parent=5 // pred_check
        %p1081 = pneg %p1080
      $region90: #{tpu_custom_call.1} parent=5 // pred_check_branch
        %1083 = sbr.rel (%p1081) target = $region92
      $region91: #{tpu_custom_call.1} parent=5 // pred_region
        %s1084 = ssub.s32 %s25, 2
        // Predicated region
        $region93: #{tpu_custom_call.1} parent=91 // pred_check
          %p1085 = pneg %p269
        $region94: #{tpu_custom_call.1} parent=91 // pred_check_branch
          %1087 = sbr.rel (%p1085) target = $region96
        $region95: #{tpu_custom_call.1} parent=91 // pred_region
          %s1088 = sand.u32 %s254, 1
          %s1089 = scalar_lea.sflag [#allocation4], %s1088
          %s1090 = sand.u32 %s254, 1
          %s1091 = smul.addr %s1090, 16
          %s1092 = scalar_lea.vmem [#allocation13], %s1091
          %1093 = dma.done %s1089, 256
        $region96: #{tpu_custom_call.1} parent=91 // pred_fallthru
          _
      $region92: #{tpu_custom_call.1} parent=5 // pred_fallthru
        _
    $region6: #{tpu_custom_call.1} parent=1 // loop_footer
      %s29 = sadd.s32 1, %s25
    $region7: #{tpu_custom_call.1} parent=1 // loop_footer_branch
      %24 = sbr.rel target = $region3
    $region8: #{tpu_custom_call.1} parent=1 // loop_exit
      _
    %1094 = vsyncpa [#allocation3], 1
    %s1095 = scalar_lea.sflag [#allocation3], 1
    %1096 = vsyncpa %s1095, 1
    %1097 = vsyncpa [#allocation6], 1
    %1098 = vsyncpa [#allocation9], 1
    %1099 = vsyncpa [#allocation12], 1
    %1100 = vsyncpa [#allocation4], 1
    %s1101 = scalar_lea.sflag [#allocation4], 1
    %1102 = vsyncpa %s1101, 1

</llo_original>
